<compile_context>
chip_gen: v7x
topology: tpu7x:2x2x1
jax: 0.10.0
libtpu: 0.0.40
codegen_flags: <defaults>
</compile_context>

<pallas_src>
import jax
import jax.numpy as jnp
from jax.experimental import pallas as pl
from jax.experimental.pallas import tpu as pltpu


def _round_up(n, m):
    return ((n + m - 1) // m) * m


def _mlp_kernel(x_ref, w1_ref, b1_ref, w2_ref, b2_ref, o_ref, acc_ref):
    """One (batch tile, hidden tile) step of y = relu(x@w1 + b1) @ w2 + b2."""
    h_idx = pl.program_id(1)

    @pl.when(h_idx == 0)
    def _init():
        acc_ref[...] = jnp.zeros_like(acc_ref)

    # fc1 chunk on the MXU: (tile_b, din_p)bf16 @ (din_p, tile_h)bf16 -> f32.
    h = jnp.dot(x_ref[...], w1_ref[...], preferred_element_type=jnp.float32)
    # Bias + ReLU in f32 (VALU work hides under the MXU; v5e-safe, no bf16 VPU).
    h = jnp.maximum(h + b1_ref[...], 0.0)
    # fc2 chunk: accumulate the (tile_b, dout_p) output in f32 across H tiles.
    acc_ref[...] += jnp.dot(h.astype(w2_ref.dtype), w2_ref[...],
                            preferred_element_type=jnp.float32)

    @pl.when(h_idx == pl.num_programs(1) - 1)
    def _finalize():
        o_ref[...] = (acc_ref[...] + b2_ref[...]).astype(o_ref.dtype)


def prepare_params(w1, b1, w2, b2):
    """One-time (per model) weight prep: reshape biases, lane-pad to 128, cast
    matmul operands to bf16.  Call once and reuse across forwards."""
    Din, H = w1.shape
    Dout = w2.shape[1]
    b1 = jnp.reshape(b1, (1, H))
    b2 = jnp.reshape(b2, (1, Dout))

    din_p = _round_up(Din, 128)
    h_p = _round_up(H, 128)
    dout_p = _round_up(Dout, 128)

    w1p = jnp.zeros((din_p, h_p), jnp.bfloat16).at[:Din, :H].set(
        w1.astype(jnp.bfloat16))
    b1p = jnp.zeros((1, h_p), jnp.float32).at[:, :H].set(b1.astype(jnp.float32))
    w2p = jnp.zeros((h_p, dout_p), jnp.bfloat16).at[:H, :Dout].set(
        w2.astype(jnp.bfloat16))
    b2p = jnp.zeros((1, dout_p), jnp.float32).at[:, :Dout].set(
        b2.astype(jnp.float32))
    return {"w1": w1p, "b1": b1p, "w2": w2p, "b2": b2p, "dims": (Din, H, Dout)}


def _pick_tile_h(h_p, requested):
    """Largest multiple of 128 that divides h_p and is <= requested."""
    cap = max(128, min(_round_up(requested, 128), h_p))
    best, t = 128, 256
    while t <= cap:
        if h_p % t == 0:
            best = t
        t += 128
    return best


def distilled_model_forward(x, params, *, tile_b=256, tile_h=512):
    """x: (B, Din) in the model dtype; params from prepare_params().

    Computes y = relu(x @ w1 + b1) @ w2 + b2  (w1/w2 stored pre-transposed,
    i.e. PyTorch Linear with W_pt = w.T).  Output dtype == x.dtype.
    """
    Din, H, Dout = params["dims"]
    w1p, b1p, w2p, b2p = params["w1"], params["b1"], params["w2"], params["b2"]
    din_p, h_p = w1p.shape
    dout_p = w2p.shape[1]

    B = x.shape[0]
    assert x.shape[1] == Din, (x.shape, Din)
    out_dtype = x.dtype

    # Batch tile: clamp to B, then round up to a sublane multiple of 8.
    tile_b = max(8, min(tile_b, _round_up(B, 8)))
    tile_b = _round_up(tile_b, 8)
    b_p = _round_up(B, tile_b)

    # Hidden tile: multiple of 128 lanes that divides h_p (single step when
    # H is small enough to keep both weight slabs resident anyway).
    tile_h = _pick_tile_h(h_p, tile_h)

    # Activation prep: skip the extra pad pass when already aligned.
    if (B, Din) == (b_p, din_p):
        xp = x if x.dtype == jnp.bfloat16 else x.astype(jnp.bfloat16)
    else:
        xp = jnp.zeros((b_p, din_p), jnp.bfloat16).at[:B, :Din].set(
            x.astype(jnp.bfloat16))

    grid = (b_p // tile_b, h_p // tile_h)

    # Advisory cost for the XLA scheduler.
    out_bytes = b_p * dout_p * jnp.dtype(out_dtype).itemsize
    cost = pl.CostEstimate(
        flops=2 * b_p * (din_p * h_p + h_p * dout_p),
        transcendentals=0,
        bytes_accessed=(b_p * din_p * 2 + din_p * h_p * 2 + h_p * 4
                        + h_p * dout_p * 2 + dout_p * 4 + out_bytes),
    )

    # VMEM budget derived from the actual (double-buffered) block footprint,
    # clamped to 48 MiB so it never exceeds v7x's 64 MiB/TC.
    vmem_need = (
        2 * tile_b * din_p * 2            # x tile (bf16, 2 buffers)
        + 2 * din_p * tile_h * 2          # w1 slab
        + 2 * tile_h * 4                  # b1 slab (f32)
        + 2 * tile_h * dout_p * 2         # w2 slab
        + 2 * dout_p * 4                  # b2
        + 2 * tile_b * dout_p * jnp.dtype(out_dtype).itemsize  # out tile
        + tile_b * dout_p * 4             # f32 accumulator scratch
        + tile_b * tile_h * 4             # f32 fc1 intermediate
    )
    vmem_limit = int(min(max(2 * vmem_need, 16 << 20), 48 << 20))

    out_padded = pl.pallas_call(
        _mlp_kernel,
        out_shape=jax.ShapeDtypeStruct((b_p, dout_p), out_dtype),
        grid=grid,
        in_specs=[
            # x tile: constant index along h -> stays resident across the
            # whole H reduction, streams/pipelines over the batch axis.
            pl.BlockSpec((tile_b, din_p), lambda i, h: (i, 0)),
            # w1 / b1 / w2 slabs stream over the H axis (double-buffered).
            pl.BlockSpec((din_p, tile_h), lambda i, h: (0, h)),
            pl.BlockSpec((1, tile_h), lambda i, h: (0, h)),
            pl.BlockSpec((tile_h, dout_p), lambda i, h: (h, 0)),
            # b2: constant, tiny.
            pl.BlockSpec((1, dout_p), lambda i, h: (0, 0)),
        ],
        # Lane-dense (128-padded) output, constant index along the reduction.
        out_specs=pl.BlockSpec((tile_b, dout_p), lambda i, h: (i, 0)),
        scratch_shapes=[pltpu.VMEM((tile_b, dout_p), jnp.float32)],
        compiler_params=pltpu.CompilerParams(
            dimension_semantics=("parallel", "arbitrary"),
            vmem_limit_bytes=vmem_limit,
        ),
        cost_estimate=cost,
    )(xp, w1p, b1p, w2p, b2p)

    if (b_p, dout_p) == (B, Dout):
        return out_padded
    return out_padded[:B, :Dout]


def reference_forward(x, w1, b1, w2, b2):
    h = jnp.maximum(x @ w1 + b1, 0.0)
    return h @ w2 + b2


if __name__ == "__main__":
    # Small shapes consistent with the module: input_size=32, hidden=64,
    # output=16, batch=16.
    B, input_size, hidden_size, output_size = 16, 32, 64, 16

    key = jax.random.PRNGKey(0)
    kx, kw1, kb1, kw2, kb2 = jax.random.split(key, 5)

    x = jax.random.normal(kx, (B, input_size), dtype=jnp.float32)
    # Deterministic PyTorch-Linear-like uniform init (biases in 1-D PyTorch shape).
    bound1 = 1.0 / (input_size ** 0.5)
    w1 = jax.random.uniform(kw1, (input_size, hidden_size),
                            minval=-bound1, maxval=bound1, dtype=jnp.float32)
    b1 = jax.random.uniform(kb1, (hidden_size,),
                            minval=-bound1, maxval=bound1, dtype=jnp.float32)
    bound2 = 1.0 / (hidden_size ** 0.5)
    w2 = jax.random.uniform(kw2, (hidden_size, output_size),
                            minval=-bound2, maxval=bound2, dtype=jnp.float32)
    b2 = jax.random.uniform(kb2, (output_size,),
                            minval=-bound2, maxval=bound2, dtype=jnp.float32)

    # One-time weight prep (padding/casting hoisted out of the forward path).
    params = prepare_params(w1, b1, w2, b2)

    out = distilled_model_forward(x, params)
    out = jax.block_until_ready(out)

    ref = reference_forward(x, w1, b1, w2, b2)
    assert out.shape == (B, output_size)
    # bf16 matmul inputs with f32 accumulation -> relaxed tolerance vs f32 ref.
    assert jnp.allclose(out, ref, atol=5e-2, rtol=5e-2), \
        float(jnp.max(jnp.abs(out - ref)))

    print("KERNEL_OK")
</pallas_src>

<mosaic_0001>
module attributes {stable_mosaic.version = 11 : i64} {
  func.func @_mlp_kernel(%arg0: i32, %arg1: i32, %arg2: memref<16x128xbf16, #tpu.memory_space<vmem>>, %arg3: memref<128x128xbf16, #tpu.memory_space<vmem>>, %arg4: memref<1x128xf32, #tpu.memory_space<vmem>>, %arg5: memref<128x128xbf16, #tpu.memory_space<vmem>>, %arg6: memref<1x128xf32, #tpu.memory_space<vmem>>, %arg7: memref<16x128xf32, #tpu.memory_space<vmem>>, %arg8: memref<16x128xf32, #tpu.memory_space<vmem>>) attributes {dimension_semantics = [#tpu.dimension_semantics<parallel>, #tpu.dimension_semantics<arbitrary>], iteration_bounds = array<i64: 1, 1>, scalar_prefetch = 0 : i64, scratch_operands = 1 : i64, tpu.core_type = #tpu.core_type<tc>, window_params = [{transform_indices = @transform_0, window_bounds = array<i64: 16, 128>}, {transform_indices = @transform_1, window_bounds = array<i64: 128, 128>}, {transform_indices = @transform_2, window_bounds = array<i64: 1, 128>}, {transform_indices = @transform_3, window_bounds = array<i64: 128, 128>}, {pipeline_mode = #tpu.pipeline_mode<synchronous>, transform_indices = @transform_4, window_bounds = array<i64: 1, 128>}, {transform_indices = @transform_5, window_bounds = array<i64: 16, 128>}]} {
    %c0_i32 = arith.constant 0 : i32
    %0 = arith.cmpi eq, %arg1, %c0_i32 : i32
    %1 = arith.extui %0 : i1 to i32
    %c0_i32_0 = arith.constant 0 : i32
    %2 = arith.cmpi ne, %1, %c0_i32_0 : i32
    scf.if %2 {
      %cst_16 = arith.constant 0.000000e+00 : f32
      %20 = vector.broadcast %cst_16 : f32 to vector<16x128xf32>
      %c0_17 = arith.constant 0 : index
      %c0_18 = arith.constant 0 : index
      %21 = vector.load %arg8[%c0_17, %c0_18] : memref<16x128xf32, #tpu.memory_space<vmem>>, vector<16x128xf32>
      tpu.vector_store %arg8[%c0_17, %c0_18], %20 {strides = array<i32>} : memref<16x128xf32, #tpu.memory_space<vmem>>, vector<16x128xf32>,
    } else {
    }
    %c0 = arith.constant 0 : index
    %c0_1 = arith.constant 0 : index
    %3 = vector.load %arg2[%c0, %c0_1] : memref<16x128xbf16, #tpu.memory_space<vmem>>, vector<16x128xbf16>
    %c0_2 = arith.constant 0 : index
    %c0_3 = arith.constant 0 : index
    %4 = vector.load %arg3[%c0_2, %c0_3] : memref<128x128xbf16, #tpu.memory_space<vmem>>, vector<128x128xbf16>
    %cst = arith.constant dense<0.000000e+00> : vector<16x128xf32>
    %5 = tpu.matmul %3, %4, %cst {dimension_numbers = #tpu.dot_dimension_numbers<[1], [0], [0], [1], [0, 0, 1, 1], [], []>} : vector<16x128xbf16>, vector<128x128xbf16>, vector<16x128xf32> -> vector<16x128xf32>
    %c0_4 = arith.constant 0 : index
    %c0_5 = arith.constant 0 : index
    %6 = vector.load %arg4[%c0_4, %c0_5] : memref<1x128xf32, #tpu.memory_space<vmem>>, vector<1x128xf32>
    %7 = vector.broadcast %6 : vector<1x128xf32> to vector<16x128xf32>
    %8 = arith.addf %5, %7 : vector<16x128xf32>
    %cst_6 = arith.constant 0.000000e+00 : f32
    %9 = vector.broadcast %cst_6 : f32 to vector<16x128xf32>
    %10 = arith.maximumf %8, %9 : vector<16x128xf32>
    %c0_7 = arith.constant 0 : index
    %c0_8 = arith.constant 0 : index
    %11 = vector.load %arg8[%c0_7, %c0_8] : memref<16x128xf32, #tpu.memory_space<vmem>>, vector<16x128xf32>
    %12 = arith.truncf %10 : vector<16x128xf32> to vector<16x128xbf16>
    %c0_9 = arith.constant 0 : index
    %c0_10 = arith.constant 0 : index
    %13 = vector.load %arg5[%c0_9, %c0_10] : memref<128x128xbf16, #tpu.memory_space<vmem>>, vector<128x128xbf16>
    %cst_11 = arith.constant dense<0.000000e+00> : vector<16x128xf32>
    %14 = tpu.matmul %12, %13, %cst_11 {dimension_numbers = #tpu.dot_dimension_numbers<[1], [0], [0], [1], [0, 0, 1, 1], [], []>} : vector<16x128xbf16>, vector<128x128xbf16>, vector<16x128xf32> -> vector<16x128xf32>
    %15 = arith.addf %11, %14 : vector<16x128xf32>
    %c0_12 = arith.constant 0 : index
    %c0_13 = arith.constant 0 : index
    %16 = vector.load %arg8[%c0_12, %c0_13] : memref<16x128xf32, #tpu.memory_space<vmem>>, vector<16x128xf32>
    tpu.vector_store %arg8[%c0_12, %c0_13], %15 {strides = array<i32>} : memref<16x128xf32, #tpu.memory_space<vmem>>, vector<16x128xf32>,
    %c0_i32_14 = arith.constant 0 : i32
    %17 = arith.cmpi eq, %arg1, %c0_i32_14 : i32
    %18 = arith.extui %17 : i1 to i32
    %c0_i32_15 = arith.constant 0 : i32
    %19 = arith.cmpi ne, %18, %c0_i32_15 : i32
    scf.if %19 {
      %c0_16 = arith.constant 0 : index
      %c0_17 = arith.constant 0 : index
      %20 = vector.load %arg8[%c0_16, %c0_17] : memref<16x128xf32, #tpu.memory_space<vmem>>, vector<16x128xf32>
      %c0_18 = arith.constant 0 : index
      %c0_19 = arith.constant 0 : index
      %21 = vector.load %arg6[%c0_18, %c0_19] : memref<1x128xf32, #tpu.memory_space<vmem>>, vector<1x128xf32>
      %22 = vector.broadcast %21 : vector<1x128xf32> to vector<16x128xf32>
      %23 = arith.addf %20, %22 : vector<16x128xf32>
      %c0_20 = arith.constant 0 : index
      %c0_21 = arith.constant 0 : index
      %24 = vector.load %arg7[%c0_20, %c0_21] : memref<16x128xf32, #tpu.memory_space<vmem>>, vector<16x128xf32>
      tpu.vector_store %arg7[%c0_20, %c0_21], %23 {strides = array<i32>} : memref<16x128xf32, #tpu.memory_space<vmem>>, vector<16x128xf32>,
    } else {
    }
    return
  }
  func.func @transform_0(%arg0: i32, %arg1: i32) -> (i32, i32) {
    %c0_i32 = arith.constant 0 : i32
    %c0_i32_0 = arith.constant 0 : i32
    return %arg0, %c0_i32 : i32, i32
  }
  func.func @transform_1(%arg0: i32, %arg1: i32) -> (i32, i32) {
    %c0_i32 = arith.constant 0 : i32
    %c0_i32_0 = arith.constant 0 : i32
    return %c0_i32, %arg1 : i32, i32
  }
  func.func @transform_2(%arg0: i32, %arg1: i32) -> (i32, i32) {
    %c0_i32 = arith.constant 0 : i32
    %c0_i32_0 = arith.constant 0 : i32
    return %c0_i32, %arg1 : i32, i32
  }
  func.func @transform_3(%arg0: i32, %arg1: i32) -> (i32, i32) {
    %c0_i32 = arith.constant 0 : i32
    %c0_i32_0 = arith.constant 0 : i32
    return %arg1, %c0_i32 : i32, i32
  }
  func.func @transform_4(%arg0: i32, %arg1: i32) -> (i32, i32) {
    %c0_i32 = arith.constant 0 : i32
    %c0_i32_0 = arith.constant 0 : i32
    %c0_i32_1 = arith.constant 0 : i32
    return %c0_i32, %c0_i32_0 : i32, i32
  }
  func.func @transform_5(%arg0: i32, %arg1: i32) -> (i32, i32) {
    %c0_i32 = arith.constant 0 : i32
    %c0_i32_0 = arith.constant 0 : i32
    return %arg0, %c0_i32 : i32, i32
  }
}

</mosaic_0001>

<llo_original>
// kernel: tpu_custom_call.1
$region0: #{tpu_custom_call.1}
  #allocation0 [shape = 'u32[]', space=smem, size = 0x4, offset = 0x4, fixed_abs, tag = 'smem constant byte address 0x4 - core index']
  #allocation1 [shape = 'u32[144,128]{1,0:T(1,128)}', space=vmem, size = 0x12000, scoped, tag = 'internal scratch']
  #allocation2 [shape = 'f32[16,128]{1,0:T(8,128)}', space=vmem, size = 0x2000, scoped, tag = 'scratch operand']
  %s0 = inlined_call_operand.hbm [shape: bf16[16,128], index: 0, kind: input, shape index: {}]
  %s1 = inlined_call_operand.hbm [shape: bf16[128,128], index: 1, kind: input, shape index: {}]
  %s2 = inlined_call_operand.vmem [shape: f32[1,128], index: 2, kind: input, shape index: {}]
  %s3 = inlined_call_operand.hbm [shape: bf16[128,128], index: 3, kind: input, shape index: {}]
  %s4 = inlined_call_operand.vmem [shape: f32[1,128], index: 4, kind: input, shape index: {}]
  %s5 = inlined_call_operand.hbm [shape: f32[16,128], index: 5, kind: output, shape index: {}]
  %s6 = sld [smem:[#allocation0]]
  $region50: #{tpu_custom_call.1} parent=0
    _
  %s8 = ssub.s32 1, %s6
  %s9 = scalar_select 0, %s8, %s6
  $region1: #{tpu_custom_call.1} parent=0
    #allocation3 [shape = 'u8[4096]{0}', space=vmem, size = 0x1000, scoped, tag = 'input window, operand 0, single buffered']
    #allocation4 [shape = 's32[1]{0}', space=sflag, size = 0x4, scoped, tag = 'scoped memory for tpu_custom_call.1']
    #allocation5 [shape = 's32[1]{0}', space=sflag, size = 0x4, scoped, tag = 'scoped memory for tpu_custom_call.1']
    #allocation6 [shape = 'u8[32768]{0}', space=vmem, size = 0x8000, scoped, tag = 'input window, operand 1, single buffered']
    #allocation7 [shape = 's32[1]{0}', space=sflag, size = 0x4, scoped, tag = 'scoped memory for tpu_custom_call.1']
    #allocation8 [shape = 'u8[32768]{0}', space=vmem, size = 0x8000, scoped, tag = 'input window, operand 3, single buffered']
    #allocation9 [shape = 'u8[8192]{0}', space=vmem, size = 0x2000, scoped, tag = 'output window, operand 0, single buffered']
    %10 = vsyncpa [#allocation4], 0
    %11 = vsyncpa [#allocation7], 0
    %12 = vsyncpa [#allocation5], 0
    // Predicated region
    $region2: #{tpu_custom_call.1} parent=1 // pred_check
      _
    $region3: #{tpu_custom_call.1} parent=1 // pred_check_branch
      %14 = sbr.rel (0) target = $region5
    $region4: #{tpu_custom_call.1} parent=1 // pred_region
      %s16 = ssub.s32 128, 128
      %17 = vsyncadd [#allocation4], %s16
      %s18 = sshll.u32 [#allocation3], 4
      %s19 = int_to_ptr.vmem [resolvable:$true] %s18
      %24 = dma.hbm_to_vmem [thread:$0]  %s0, 128, %s19, [#allocation4], 64, 64, 4
    $region5: #{tpu_custom_call.1} parent=1 // pred_fallthru
      _
    // Predicated region
    $region6: #{tpu_custom_call.1} parent=1 // pred_check
      _
    $region7: #{tpu_custom_call.1} parent=1 // pred_check_branch
      %26 = sbr.rel (0) target = $region9
    $region8: #{tpu_custom_call.1} parent=1 // pred_region
      %s28 = ssub.s32 1024, 1024
      %29 = vsyncadd [#allocation7], %s28
      %s30 = sshll.u32 [#allocation6], 4
      %s31 = int_to_ptr.vmem [resolvable:$true] %s30
      %36 = dma.hbm_to_vmem [thread:$0]  %s1, 1024, %s31, [#allocation7], 64, 64, 4
    $region9: #{tpu_custom_call.1} parent=1 // pred_fallthru
      _
    // Predicated region
    $region10: #{tpu_custom_call.1} parent=1 // pred_check
      _
    $region11: #{tpu_custom_call.1} parent=1 // pred_check_branch
      %38 = sbr.rel (0) target = $region13
    $region12: #{tpu_custom_call.1} parent=1 // pred_region
      _
    $region13: #{tpu_custom_call.1} parent=1 // pred_fallthru
      _
    // Predicated region
    $region14: #{tpu_custom_call.1} parent=1 // pred_check
      _
    $region15: #{tpu_custom_call.1} parent=1 // pred_check_branch
      %40 = sbr.rel (0) target = $region17
    $region16: #{tpu_custom_call.1} parent=1 // pred_region
      %s42 = ssub.s32 1024, 1024
      %43 = vsyncadd [#allocation7], %s42
      %s44 = sshll.u32 [#allocation8], 4
      %s45 = int_to_ptr.vmem [resolvable:$true] %s44
      %50 = dma.hbm_to_vmem [thread:$0]  %s3, 1024, %s45, [#allocation7], 64, 64, 4
    $region17: #{tpu_custom_call.1} parent=1 // pred_fallthru
      _
    // Predicated region
    $region18: #{tpu_custom_call.1} parent=1 // pred_check
      _
    $region19: #{tpu_custom_call.1} parent=1 // pred_check_branch
      %52 = sbr.rel (0) target = $region21
    $region20: #{tpu_custom_call.1} parent=1 // pred_region
      _
    $region21: #{tpu_custom_call.1} parent=1 // pred_fallthru
      _
    // Predicated region
    $region22: #{tpu_custom_call.1} parent=1 // pred_check
      _
    $region23: #{tpu_custom_call.1} parent=1 // pred_check_branch
      %54 = sbr.rel (0) target = $region25
    $region24: #{tpu_custom_call.1} parent=1 // pred_region
      %55 = dma.done [#allocation4], 128
    $region25: #{tpu_custom_call.1} parent=1 // pred_fallthru
      _
    // Predicated region
    $region26: #{tpu_custom_call.1} parent=1 // pred_check
      _
    $region27: #{tpu_custom_call.1} parent=1 // pred_check_branch
      %57 = sbr.rel (0) target = $region29
    $region28: #{tpu_custom_call.1} parent=1 // pred_region
      %58 = dma.done [#allocation7], 1024
    $region29: #{tpu_custom_call.1} parent=1 // pred_fallthru
      _
    // Predicated region
    $region30: #{tpu_custom_call.1} parent=1 // pred_check
      _
    $region31: #{tpu_custom_call.1} parent=1 // pred_check_branch
      %60 = sbr.rel (0) target = $region33
    $region32: #{tpu_custom_call.1} parent=1 // pred_region
      %61 = dma.done [#allocation7], 1024
    $region33: #{tpu_custom_call.1} parent=1 // pred_fallthru
      _
    %p63 = scmp.eq.s32.totalorder 0, 0
    // Predicated region
    $region34: #{tpu_custom_call.1} parent=1 // pred_check
      %p64 = pneg %p63
    $region35: #{tpu_custom_call.1} parent=1 // pred_check_branch
      %66 = sbr.rel (%p64) target = $region37
    $region36: #{tpu_custom_call.1} parent=1 // pred_region
      %67 = vst [vmem:[#allocation2] sm:$0xff] 0.0
      %68 = vst [vmem:[#allocation2 + $0x8] sm:$0xff] 0.0
    $region37: #{tpu_custom_call.1} parent=1 // pred_fallthru
      _
    %v69 = vld [vmem:[#allocation3] sm:$0xf]
    %v70 = vld [vmem:[#allocation3 + $0x4] sm:$0xf]
    %v71 = vld [vmem:[#allocation6] sm:$0xf]
    %v72 = vld [vmem:[#allocation6 + $0x4] sm:$0xf]
    %v73 = vld [vmem:[#allocation6 + $0x8] sm:$0xf]
    %v74 = vld [vmem:[#allocation6 + $0xc] sm:$0xf]
    %v75 = vld [vmem:[#allocation6 + $0x10] sm:$0xf]
    %v76 = vld [vmem:[#allocation6 + $0x14] sm:$0xf]
    %v77 = vld [vmem:[#allocation6 + $0x18] sm:$0xf]
    %v78 = vld [vmem:[#allocation6 + $0x1c] sm:$0xf]
    %v79 = vld [vmem:[#allocation6 + $0x20] sm:$0xf]
    %v80 = vld [vmem:[#allocation6 + $0x24] sm:$0xf]
    %v81 = vld [vmem:[#allocation6 + $0x28] sm:$0xf]
    %v82 = vld [vmem:[#allocation6 + $0x2c] sm:$0xf]
    %v83 = vld [vmem:[#allocation6 + $0x30] sm:$0xf]
    %v84 = vld [vmem:[#allocation6 + $0x34] sm:$0xf]
    %v85 = vld [vmem:[#allocation6 + $0x38] sm:$0xf]
    %v86 = vld [vmem:[#allocation6 + $0x3c] sm:$0xf]
    %v87 = vld [vmem:[%s2] sm:$0x1]
    %v89 = vlaneseq
    %v90 = vshrl.u32 %v89, 7
    %v91 = vsub.s32 0, %v90
    %v92 = vrot.slane %v87, %v91
    %v96 = vunpack.c.l.b16 %v69
    %v97 = vunpack.c.l.b16 %v70
    %v98 = vpack.c.b16 %v97, %v96
    %v116 = vunpack.c.l.b16 %v71
    %v117 = vunpack.c.l.b16 %v72
    %v118 = vunpack.c.l.b16 %v73
    %v119 = vunpack.c.l.b16 %v74
    %v120 = vunpack.c.l.b16 %v75
    %v121 = vunpack.c.l.b16 %v76
    %v122 = vunpack.c.l.b16 %v77
    %v123 = vunpack.c.l.b16 %v78
    %v124 = vunpack.c.l.b16 %v79
    %v125 = vunpack.c.l.b16 %v80
    %v126 = vunpack.c.l.b16 %v81
    %v127 = vunpack.c.l.b16 %v82
    %v128 = vunpack.c.l.b16 %v83
    %v129 = vunpack.c.l.b16 %v84
    %v130 = vunpack.c.l.b16 %v85
    %v131 = vunpack.c.l.b16 %v86
    %v132 = vpack.c.b16 %v117, %v116
    %v133 = vpack.c.b16 %v119, %v118
    %v134 = vpack.c.b16 %v121, %v120
    %v135 = vpack.c.b16 %v123, %v122
    %v136 = vpack.c.b16 %v125, %v124
    %v137 = vpack.c.b16 %v127, %v126
    %v138 = vpack.c.b16 %v129, %v128
    %v139 = vpack.c.b16 %v131, %v130
    %148 = vmatprep.subr.bf16.mxu0 0
    %149 = vmatpush1.bf16.msra.mxu0 %v132
    %150 = vmatprep.subr.bf16.mxu0 0
    %151 = vmatpush1.bf16.msra.mxu0 %v133
    %152 = vmatprep.subr.bf16.mxu0 0
    %153 = vmatpush1.bf16.msra.mxu0 %v134
    %154 = vmatprep.subr.bf16.mxu0 0
    %155 = vmatpush1.bf16.msra.mxu0 %v135
    %156 = vmatprep.subr.bf16.mxu0 0
    %157 = vmatpush1.bf16.msra.mxu0 %v136
    %158 = vmatprep.subr.bf16.mxu0 0
    %159 = vmatpush1.bf16.msra.mxu0 %v137
    %160 = vmatprep.subr.bf16.mxu0 0
    %161 = vmatpush1.bf16.msra.mxu0 %v138
    %162 = vmatprep.subr.bf16.mxu0 0
    %163 = vmatpush1.bf16.msra.mxu0 %v139
    %164 = vmatprep.subr.bf16.mxu0 0
    %165 = vmatpush1.bf16.msra.mxu0 0
    %166 = vmatprep.subr.bf16.mxu0 0
    %167 = vmatpush1.bf16.msra.mxu0 0
    %168 = vmatprep.subr.bf16.mxu0 0
    %169 = vmatpush1.bf16.msra.mxu0 0
    %170 = vmatprep.subr.bf16.mxu0 0
    %171 = vmatpush1.bf16.msra.mxu0 0
    %172 = vmatprep.subr.bf16.mxu0 0
    %173 = vmatpush1.bf16.msra.mxu0 0
    %174 = vmatprep.subr.bf16.mxu0 0
    %175 = vmatpush1.bf16.msra.mxu0 0
    %176 = vmatprep.subr.bf16.mxu0 0
    %177 = vmatpush1.bf16.msra.mxu0 0
    %178 = vmatprep.subr.bf16.mxu0 0
    %179 = vmatpush1.bf16.msra.mxu0 0
    %180 = vmatprep.mubr.bf16.mxu0 0
    %181 = vmatmul.mubr.bf16.gmra.mrb[0].mxu0 %v98
    %v182 = vpop.f32.mrb[0].mxu0
    %v183 = vadd.f32 %v92, %v182
    %v184 = vpop.f32.mrb[0].mxu0
    %v185 = vpop.f32.mrb[0].mxu0
    %v186 = vadd.f32 %v92, %v185
    %v187 = vpop.f32.mrb[0].mxu0
    %188 = vdwg.mxu0
    %v189 = vmax.f32 %v183, 0.0
    %v190 = vmax.f32 %v186, 0.0
    %v191 = vld [vmem:[#allocation2] sm:$0xff]
    %v192 = vld [vmem:[#allocation2 + $0x8] sm:$0xff]
    %v193 = vpack.c.bf16 %v190, %v189
    %v194 = vld [vmem:[#allocation8] sm:$0xf]
    %v195 = vld [vmem:[#allocation8 + $0x4] sm:$0xf]
    %v196 = vld [vmem:[#allocation8 + $0x8] sm:$0xf]
    %v197 = vld [vmem:[#allocation8 + $0xc] sm:$0xf]
    %v198 = vld [vmem:[#allocation8 + $0x10] sm:$0xf]
    %v199 = vld [vmem:[#allocation8 + $0x14] sm:$0xf]
    %v200 = vld [vmem:[#allocation8 + $0x18] sm:$0xf]
    %v201 = vld [vmem:[#allocation8 + $0x1c] sm:$0xf]
    %v202 = vld [vmem:[#allocation8 + $0x20] sm:$0xf]
    %v203 = vld [vmem:[#allocation8 + $0x24] sm:$0xf]
    %v204 = vld [vmem:[#allocation8 + $0x28] sm:$0xf]
    %v205 = vld [vmem:[#allocation8 + $0x2c] sm:$0xf]
    %v206 = vld [vmem:[#allocation8 + $0x30] sm:$0xf]
    %v207 = vld [vmem:[#allocation8 + $0x34] sm:$0xf]
    %v208 = vld [vmem:[#allocation8 + $0x38] sm:$0xf]
    %v209 = vld [vmem:[#allocation8 + $0x3c] sm:$0xf]
    %v226 = vunpack.c.l.b16 %v194
    %v227 = vunpack.c.l.b16 %v195
    %v228 = vunpack.c.l.b16 %v196
    %v229 = vunpack.c.l.b16 %v197
    %v230 = vunpack.c.l.b16 %v198
    %v231 = vunpack.c.l.b16 %v199
    %v232 = vunpack.c.l.b16 %v200
    %v233 = vunpack.c.l.b16 %v201
    %v234 = vunpack.c.l.b16 %v202
    %v235 = vunpack.c.l.b16 %v203
    %v236 = vunpack.c.l.b16 %v204
    %v237 = vunpack.c.l.b16 %v205
    %v238 = vunpack.c.l.b16 %v206
    %v239 = vunpack.c.l.b16 %v207
    %v240 = vunpack.c.l.b16 %v208
    %v241 = vunpack.c.l.b16 %v209
    %v242 = vpack.c.b16 %v227, %v226
    %v243 = vpack.c.b16 %v229, %v228
    %v244 = vpack.c.b16 %v231, %v230
    %v245 = vpack.c.b16 %v233, %v232
    %v246 = vpack.c.b16 %v235, %v234
    %v247 = vpack.c.b16 %v237, %v236
    %v248 = vpack.c.b16 %v239, %v238
    %v249 = vpack.c.b16 %v241, %v240
    %258 = vmatprep.subr.bf16.mxu0 0
    %259 = vmatpush1.bf16.msra.mxu0 %v242
    %260 = vmatprep.subr.bf16.mxu0 0
    %261 = vmatpush1.bf16.msra.mxu0 %v243
    %262 = vmatprep.subr.bf16.mxu0 0
    %263 = vmatpush1.bf16.msra.mxu0 %v244
    %264 = vmatprep.subr.bf16.mxu0 0
    %265 = vmatpush1.bf16.msra.mxu0 %v245
    %266 = vmatprep.subr.bf16.mxu0 0
    %267 = vmatpush1.bf16.msra.mxu0 %v246
    %268 = vmatprep.subr.bf16.mxu0 0
    %269 = vmatpush1.bf16.msra.mxu0 %v247
    %270 = vmatprep.subr.bf16.mxu0 0
    %271 = vmatpush1.bf16.msra.mxu0 %v248
    %272 = vmatprep.subr.bf16.mxu0 0
    %273 = vmatpush1.bf16.msra.mxu0 %v249
    %274 = vmatprep.subr.bf16.mxu0 0
    %275 = vmatpush1.bf16.msra.mxu0 0
    %276 = vmatprep.subr.bf16.mxu0 0
    %277 = vmatpush1.bf16.msra.mxu0 0
    %278 = vmatprep.subr.bf16.mxu0 0
    %279 = vmatpush1.bf16.msra.mxu0 0
    %280 = vmatprep.subr.bf16.mxu0 0
    %281 = vmatpush1.bf16.msra.mxu0 0
    %282 = vmatprep.subr.bf16.mxu0 0
    %283 = vmatpush1.bf16.msra.mxu0 0
    %284 = vmatprep.subr.bf16.mxu0 0
    %285 = vmatpush1.bf16.msra.mxu0 0
    %286 = vmatprep.subr.bf16.mxu0 0
    %287 = vmatpush1.bf16.msra.mxu0 0
    %288 = vmatprep.subr.bf16.mxu0 0
    %289 = vmatpush1.bf16.msra.mxu0 0
    %290 = vmatprep.mubr.bf16.mxu0 0
    %291 = vmatmul.mubr.bf16.gmra.mrb[0].mxu0 %v193
    %v292 = vpop.f32.mrb[0].mxu0
    %v293 = vadd.f32 0.0, %v292
    %v294 = vpop.f32.mrb[0].mxu0
    %v295 = vpop.f32.mrb[0].mxu0
    %v296 = vadd.f32 0.0, %v295
    %v297 = vpop.f32.mrb[0].mxu0
    %298 = vdwg.mxu0
    %v299 = vadd.f32 %v191, %v293
    %v300 = vadd.f32 %v192, %v296
    %301 = vst [vmem:[#allocation2] sm:$0xff] %v299
    %302 = vst [vmem:[#allocation2 + $0x8] sm:$0xff] %v300
    // Predicated region
    $region38: #{tpu_custom_call.1} parent=1 // pred_check
      %p303 = pneg %p63
    $region39: #{tpu_custom_call.1} parent=1 // pred_check_branch
      %305 = sbr.rel (%p303) target = $region41
    $region40: #{tpu_custom_call.1} parent=1 // pred_region
      %v306 = vld [vmem:[#allocation2] sm:$0xff]
      %v307 = vld [vmem:[#allocation2 + $0x8] sm:$0xff]
      %v308 = vld [vmem:[%s4] sm:$0x1]
      %v310 = vlaneseq
      %v311 = vshrl.u32 %v310, 7
      %v312 = vsub.s32 0, %v311
      %v313 = vrot.slane %v308, %v312
      %v315 = vadd.f32 %v306, %v313
      %v316 = vadd.f32 %v307, %v313
      %317 = vst [vmem:[#allocation9] sm:$0xff] %v315
      %318 = vst [vmem:[#allocation9 + $0x8] sm:$0xff] %v316
    $region41: #{tpu_custom_call.1} parent=1 // pred_fallthru
      _
    // Predicated region
    $region42: #{tpu_custom_call.1} parent=1 // pred_check
      _
    $region43: #{tpu_custom_call.1} parent=1 // pred_check_branch
      %320 = sbr.rel (0) target = $region45
    $region44: #{tpu_custom_call.1} parent=1 // pred_region
      %s322 = ssub.s32 256, 256
      %323 = vsyncadd [#allocation5], %s322
      %s324 = sshll.u32 [#allocation9], 4
      %s325 = int_to_ptr.vmem [resolvable:$true] %s324
      %330 = dma.vmem_to_hbm [thread:$0]  %s325, 256, %s5, [#allocation5], 128, 128, 8
    $region45: #{tpu_custom_call.1} parent=1 // pred_fallthru
      _
    // Predicated region
    $region46: #{tpu_custom_call.1} parent=1 // pred_check
      _
    $region47: #{tpu_custom_call.1} parent=1 // pred_check_branch
      %332 = sbr.rel (0) target = $region49
    $region48: #{tpu_custom_call.1} parent=1 // pred_region
      %333 = dma.done [#allocation5], 256
    $region49: #{tpu_custom_call.1} parent=1 // pred_fallthru
      _
    %334 = vsyncpa [#allocation4], 1
    %335 = vsyncpa [#allocation7], 1
    %336 = vsyncpa [#allocation5], 1

</llo_original>
